<compile_context>
chip_gen: v6e
topology: v6e:2x2x1
jax: 0.10.0
libtpu: 0.0.40
codegen_flags: <defaults>
</compile_context>

<pallas_src>
import jax
import jax.numpy as jnp
from jax.experimental import pallas as pl
from jax.experimental.pallas import tpu as pltpu


def _round_up(n, m):
    return ((n + m - 1) // m) * m


def _cdiv(a, b):
    return -(-a // b)


def _linear_kernel(x_ref, wt_ref, b_ref, o_ref):
    # x_ref : (TB, D_in)   one batch tile per grid step
    # wt_ref: (D_in, TN)   pre-transposed weight tile (resident when TN == D_out_p)
    # b_ref : (1, TN)      bias tile (f32)
    # o_ref : (TB, TN)     lane-dense output tile (TN % 128 == 0)
    acc = jnp.dot(x_ref[...], wt_ref[...], preferred_element_type=jnp.float32)
    o_ref[...] = (acc + b_ref[...]).astype(o_ref.dtype)


def _vmem_capacity_bytes():
    try:
        return int(pltpu.get_tpu_info().vmem_capacity_bytes)
    except Exception:
        return 64 * 1024 * 1024  # conservative default (v7x per-TC VMEM)


def linear_forward(x, weight, bias, *, block_b=1024, compute_dtype=None):
    """y = x @ weight.T + bias   (PyTorch nn.Linear semantics).

    x:      (B, D_in)     float32
    weight: (D_out, D_in) float32  (PyTorch layout)
    bias:   (D_out,)      float32
    returns (B, D_out)    float32
    """
    B, D_in = x.shape
    D_out = weight.shape[0]
    out_dtype = x.dtype
    out_itemsize = jnp.dtype(out_dtype).itemsize

    # ---- Optional reduced-precision compute (keeps f32 accumulate + f32 bias).
    if compute_dtype is not None:
        x_c = x.astype(compute_dtype)
        w_c = weight.astype(compute_dtype)
    else:
        x_c = x
        w_c = weight
    comp_itemsize = jnp.dtype(x_c.dtype).itemsize

    # ---- Lane-dense output: pad D_out up to a multiple of 128. --------------
    D_out_p = _round_up(max(D_out, 128), 128)

    # ---- Pre-transpose W once: (D_out, D_in) -> (D_in, D_out_p). ------------
    w_t = w_c.T
    if D_out_p != D_out:
        w_t = jnp.pad(w_t, ((0, 0), (0, D_out_p - D_out)))
        bias = jnp.pad(bias, (0, D_out_p - D_out))
    b2d = bias.reshape(1, D_out_p).astype(jnp.float32)

    # ---- VMEM budget (generation aware). ------------------------------------
    vmem_cap = int(0.8 * _vmem_capacity_bytes())

    # ---- D_out tiling: keep W resident when it fits comfortably, else stream.
    w_bytes = D_in * D_out_p * comp_itemsize
    resident_budget = min(vmem_cap // 3, 32 * 1024 * 1024)
    if w_bytes <= resident_budget:
        TN = D_out_p
    else:
        TN = 128
        for cand in (2048, 1024, 512, 256, 128):
            if D_out_p % cand == 0 and 2 * D_in * cand * comp_itemsize <= resident_budget:
                TN = cand
                break
    num_n_tiles = D_out_p // TN
    w_resident = num_n_tiles == 1

    # ---- Batch tiling: no HBM padding of x — cdiv grid + masked last tile. --
    if B >= 8:
        TB = max(8, (min(block_b, B) // 8) * 8)   # sublane-aligned, <= B
    else:
        TB = B                                    # single full-dim block

    def _tile_bytes(tb):
        x_b = 2 * tb * D_in * comp_itemsize                       # x, double-buffered
        o_b = 2 * tb * TN * out_itemsize                          # out, double-buffered
        w_b = (1 if w_resident else 2) * D_in * TN * comp_itemsize
        b_b = (1 if w_resident else 2) * TN * 4
        return x_b + o_b + w_b + b_b

    while TB > 8 and _tile_bytes(TB) > vmem_cap:
        TB = max(8, ((TB // 2) // 8) * 8)

    num_b_tiles = _cdiv(B, TB)
    # v7x has 2 TensorCores sharding "parallel" grid axes: give both work.
    if num_b_tiles == 1 and num_n_tiles == 1 and B >= 16:
        TB = _round_up(_cdiv(B, 2), 8)
        num_b_tiles = _cdiv(B, TB)

    vmem_limit = int(min(vmem_cap, max(int(1.25 * _tile_bytes(TB)), 8 * 1024 * 1024)))

    cost = pl.CostEstimate(
        flops=2 * B * D_in * D_out_p,
        transcendentals=0,
        bytes_accessed=(B * D_in + D_in * D_out_p) * comp_itemsize
        + D_out_p * 4
        + B * D_out_p * out_itemsize,
    )

    def _run(single_buffer_resident):
        if w_resident and single_buffer_resident:
            w_spec = pl.BlockSpec((D_in, TN), lambda i, j: (0, j),
                                  pipeline_mode=pl.Buffered(1))
            b_spec = pl.BlockSpec((1, TN), lambda i, j: (0, j),
                                  pipeline_mode=pl.Buffered(1))
        else:
            w_spec = pl.BlockSpec((D_in, TN), lambda i, j: (0, j))
            b_spec = pl.BlockSpec((1, TN), lambda i, j: (0, j))

        return pl.pallas_call(
            _linear_kernel,
            out_shape=jax.ShapeDtypeStruct((B, D_out_p), out_dtype),
            grid_spec=pltpu.PrefetchScalarGridSpec(
                num_scalar_prefetch=0,
                grid=(num_b_tiles, num_n_tiles),
                in_specs=[
                    pl.BlockSpec((TB, D_in), lambda i, j: (i, 0)),   # x: per-batch tile
                    w_spec,                                          # W^T tile
                    b_spec,                                          # bias tile
                ],
                out_specs=pl.BlockSpec((TB, TN), lambda i, j: (i, j)),
            ),
            compiler_params=pltpu.CompilerParams(
                dimension_semantics=("parallel", "parallel"),  # independent output tiles
                vmem_limit_bytes=vmem_limit,
            ),
            cost_estimate=cost,
        )(x_c, w_t, b2d)

    try:
        out_p = _run(True)
    except Exception:
        # Some JAX versions reject Buffered(1); retry with default buffering.
        out_p = _run(False)

    # Strip the lane padding (plain XLA slice; batch was never padded).
    return out_p[:, :D_out]


if __name__ == "__main__":
    # Small shapes consistent with LogisticRegression(input_dim, output_dim)
    batch, input_dim, output_dim = 8, 32, 16

    key = jax.random.PRNGKey(0)
    kx, kw, kb = jax.random.split(key, 3)

    x = jax.random.normal(kx, (batch, input_dim), dtype=jnp.float32)

    # Deterministic init mirroring nn.Linear's uniform(-1/sqrt(fan_in), 1/sqrt(fan_in))
    bound = 1.0 / (input_dim ** 0.5)
    weight = jax.random.uniform(kw, (output_dim, input_dim),
                                minval=-bound, maxval=bound, dtype=jnp.float32)
    bias = jax.random.uniform(kb, (output_dim,),
                              minval=-bound, maxval=bound, dtype=jnp.float32)

    out = linear_forward(x, weight, bias)
    out = jax.block_until_ready(out)

    # Correctness check against plain-JAX reference (f32 compute path is exact)
    ref = x @ weight.T + bias
    assert out.shape == (batch, output_dim)
    assert jnp.allclose(out, ref, atol=1e-5, rtol=1e-5)

    print("KERNEL_OK")
</pallas_src>

<mosaic_0001>
module attributes {stable_mosaic.version = 11 : i64} {
  func.func @_linear_kernel(%arg0: i32, %arg1: i32, %arg2: memref<8x32xf32, #tpu.memory_space<vmem>>, %arg3: memref<32x128xf32, #tpu.memory_space<vmem>>, %arg4: memref<1x128xf32, #tpu.memory_space<vmem>>, %arg5: memref<8x128xf32, #tpu.memory_space<vmem>>) attributes {dimension_semantics = [#tpu.dimension_semantics<parallel>, #tpu.dimension_semantics<parallel>], iteration_bounds = array<i64: 1, 1>, scalar_prefetch = 0 : i64, scratch_operands = 0 : i64, tpu.core_type = #tpu.core_type<tc>, window_params = [{transform_indices = @transform_0, window_bounds = array<i64: 8, 32>}, {pipeline_mode = #tpu.pipeline_mode<synchronous>, transform_indices = @transform_1, window_bounds = array<i64: 32, 128>}, {pipeline_mode = #tpu.pipeline_mode<synchronous>, transform_indices = @transform_2, window_bounds = array<i64: 1, 128>}, {transform_indices = @transform_3, window_bounds = array<i64: 8, 128>}]} {
    %c0 = arith.constant 0 : index
    %c0_0 = arith.constant 0 : index
    %0 = vector.load %arg2[%c0, %c0_0] : memref<8x32xf32, #tpu.memory_space<vmem>>, vector<8x32xf32>
    %c0_1 = arith.constant 0 : index
    %c0_2 = arith.constant 0 : index
    %1 = vector.load %arg3[%c0_1, %c0_2] : memref<32x128xf32, #tpu.memory_space<vmem>>, vector<32x128xf32>
    %cst = arith.constant dense<0.000000e+00> : vector<8x128xf32>
    %2 = tpu.matmul %0, %1, %cst {dimension_numbers = #tpu.dot_dimension_numbers<[1], [0], [0], [1], [0, 0, 1, 1], [], []>} : vector<8x32xf32>, vector<32x128xf32>, vector<8x128xf32> -> vector<8x128xf32>
    %c0_3 = arith.constant 0 : index
    %c0_4 = arith.constant 0 : index
    %3 = vector.load %arg4[%c0_3, %c0_4] : memref<1x128xf32, #tpu.memory_space<vmem>>, vector<1x128xf32>
    %4 = vector.broadcast %3 : vector<1x128xf32> to vector<8x128xf32>
    %5 = arith.addf %2, %4 : vector<8x128xf32>
    %c0_5 = arith.constant 0 : index
    %c0_6 = arith.constant 0 : index
    %6 = vector.load %arg5[%c0_5, %c0_6] : memref<8x128xf32, #tpu.memory_space<vmem>>, vector<8x128xf32>
    tpu.vector_store %arg5[%c0_5, %c0_6], %5 {strides = array<i32>} : memref<8x128xf32, #tpu.memory_space<vmem>>, vector<8x128xf32>,
    return
  }
  func.func @transform_0(%arg0: i32, %arg1: i32) -> (i32, i32) {
    %c0_i32 = arith.constant 0 : i32
    %c0_i32_0 = arith.constant 0 : i32
    return %arg0, %c0_i32 : i32, i32
  }
  func.func @transform_1(%arg0: i32, %arg1: i32) -> (i32, i32) {
    %c0_i32 = arith.constant 0 : i32
    %c0_i32_0 = arith.constant 0 : i32
    return %c0_i32, %arg1 : i32, i32
  }
  func.func @transform_2(%arg0: i32, %arg1: i32) -> (i32, i32) {
    %c0_i32 = arith.constant 0 : i32
    %c0_i32_0 = arith.constant 0 : i32
    return %c0_i32, %arg1 : i32, i32
  }
  func.func @transform_3(%arg0: i32, %arg1: i32) -> (i32, i32) {
    %c0_i32 = arith.constant 0 : i32
    return %arg0, %arg1 : i32, i32
  }
}

module attributes {stable_mosaic.version = 11 : i64} {
  func.func @_linear_kernel(%arg0: i32, %arg1: i32, %arg2: memref<8x32xf32, #tpu.memory_space<vmem>>, %arg3: memref<32x128xf32, #tpu.memory_space<vmem>>, %arg4: memref<1x128xf32, #tpu.memory_space<vmem>>, %arg5: memref<8x128xf32, #tpu.memory_space<vmem>>) attributes {dimension_semantics = [#tpu.dimension_semantics<parallel>, #tpu.dimension_semantics<parallel>], iteration_bounds = array<i64: 1, 1>, scalar_prefetch = 0 : i64, scratch_operands = 0 : i64, tpu.core_type = #tpu.core_type<tc>, window_params = [{transform_indices = @transform_0, window_bounds = array<i64: 8, 32>}, {transform_indices = @transform_1, window_bounds = array<i64: 32, 128>}, {transform_indices = @transform_2, window_bounds = array<i64: 1, 128>}, {transform_indices = @transform_3, window_bounds = array<i64: 8, 128>}]} {
    %c0 = arith.constant 0 : index
    %c0_0 = arith.constant 0 : index
    %0 = vector.load %arg2[%c0, %c0_0] : memref<8x32xf32, #tpu.memory_space<vmem>>, vector<8x32xf32>
    %c0_1 = arith.constant 0 : index
    %c0_2 = arith.constant 0 : index
    %1 = vector.load %arg3[%c0_1, %c0_2] : memref<32x128xf32, #tpu.memory_space<vmem>>, vector<32x128xf32>
    %cst = arith.constant dense<0.000000e+00> : vector<8x128xf32>
    %2 = tpu.matmul %0, %1, %cst {dimension_numbers = #tpu.dot_dimension_numbers<[1], [0], [0], [1], [0, 0, 1, 1], [], []>} : vector<8x32xf32>, vector<32x128xf32>, vector<8x128xf32> -> vector<8x128xf32>
    %c0_3 = arith.constant 0 : index
    %c0_4 = arith.constant 0 : index
    %3 = vector.load %arg4[%c0_3, %c0_4] : memref<1x128xf32, #tpu.memory_space<vmem>>, vector<1x128xf32>
    %4 = vector.broadcast %3 : vector<1x128xf32> to vector<8x128xf32>
    %5 = arith.addf %2, %4 : vector<8x128xf32>
    %c0_5 = arith.constant 0 : index
    %c0_6 = arith.constant 0 : index
    %6 = vector.load %arg5[%c0_5, %c0_6] : memref<8x128xf32, #tpu.memory_space<vmem>>, vector<8x128xf32>
    tpu.vector_store %arg5[%c0_5, %c0_6], %5 {strides = array<i32>} : memref<8x128xf32, #tpu.memory_space<vmem>>, vector<8x128xf32>,
    return
  }
  func.func @transform_0(%arg0: i32, %arg1: i32) -> (i32, i32) {
    %c0_i32 = arith.constant 0 : i32
    %c0_i32_0 = arith.constant 0 : i32
    return %arg0, %c0_i32 : i32, i32
  }
  func.func @transform_1(%arg0: i32, %arg1: i32) -> (i32, i32) {
    %c0_i32 = arith.constant 0 : i32
    %c0_i32_0 = arith.constant 0 : i32
    return %c0_i32, %arg1 : i32, i32
  }
  func.func @transform_2(%arg0: i32, %arg1: i32) -> (i32, i32) {
    %c0_i32 = arith.constant 0 : i32
    %c0_i32_0 = arith.constant 0 : i32
    return %c0_i32, %arg1 : i32, i32
  }
  func.func @transform_3(%arg0: i32, %arg1: i32) -> (i32, i32) {
    %c0_i32 = arith.constant 0 : i32
    return %arg0, %arg1 : i32, i32
  }
}

</mosaic_0001>

<llo_original>
// kernel: tpu_custom_call.1
$region0: #{tpu_custom_call.1}
  #allocation0 [shape = 'u32[]', space=smem, size = 0x4, offset = 0x4, fixed_abs, tag = 'smem constant byte address 0x4 - core index']
  #allocation1 [shape = 'u32[144,128]{1,0:T(1,128)}', space=vmem, size = 0x12000, scoped, tag = 'internal scratch']
  %s0 = inlined_call_operand.hbm [shape: f32[8,32], index: 0, kind: input, shape index: {}]
  %s1 = inlined_call_operand.hbm [shape: f32[32,128], index: 1, kind: input, shape index: {}]
  %s2 = inlined_call_operand.vmem [shape: f32[1,128], index: 2, kind: input, shape index: {}]
  %s3 = inlined_call_operand.hbm [shape: f32[8,128], index: 3, kind: output, shape index: {}]
  %s4 = sld [smem:[#allocation0]]
  $region30: #{tpu_custom_call.1} parent=0
    _
  %s6 = ssub.s32 1, %s4
  %s7 = scalar_select 0, %s6, %s4
  $region1: #{tpu_custom_call.1} parent=0
    #allocation2 [shape = 'u8[4096]{0}', space=vmem, size = 0x1000, scoped, tag = 'input window, operand 0, single buffered']
    #allocation3 [shape = 's32[1]{0}', space=sflag, size = 0x4, scoped, tag = 'scoped memory for tpu_custom_call.1']
    #allocation4 [shape = 's32[1]{0}', space=sflag, size = 0x4, scoped, tag = 'scoped memory for tpu_custom_call.1']
    #allocation5 [shape = 'u8[16384]{0}', space=vmem, size = 0x4000, scoped, tag = 'input window, operand 1, single buffered']
    #allocation6 [shape = 's32[1]{0}', space=sflag, size = 0x4, scoped, tag = 'scoped memory for tpu_custom_call.1']
    #allocation7 [shape = 'u8[4096]{0}', space=vmem, size = 0x1000, scoped, tag = 'output window, operand 0, single buffered']
    %8 = vsyncpa [#allocation3], 0
    %9 = vsyncpa [#allocation6], 0
    %10 = vsyncpa [#allocation4], 0
    // Predicated region
    $region2: #{tpu_custom_call.1} parent=1 // pred_check
      _
    $region3: #{tpu_custom_call.1} parent=1 // pred_check_branch
      %12 = sbr.rel (0) target = $region5
    $region4: #{tpu_custom_call.1} parent=1 // pred_region
      %s14 = ssub.s32 128, 128
      %15 = vsyncadd [#allocation3], %s14
      %s17 = sshll.u32 [#allocation2], 4
      %s18 = int_to_ptr.vmem [resolvable:$true] %s17
      %20 = dma.hbm_to_vmem [thread:$0]  %s0, 128, %s18, [#allocation3]
    $region5: #{tpu_custom_call.1} parent=1 // pred_fallthru
      _
    // Predicated region
    $region6: #{tpu_custom_call.1} parent=1 // pred_check
      _
    $region7: #{tpu_custom_call.1} parent=1 // pred_check_branch
      %22 = sbr.rel (0) target = $region9
    $region8: #{tpu_custom_call.1} parent=1 // pred_region
      %s24 = ssub.s32 512, 512
      %25 = vsyncadd [#allocation6], %s24
      %s26 = sshll.u32 [#allocation5], 4
      %s27 = int_to_ptr.vmem [resolvable:$true] %s26
      %32 = dma.hbm_to_vmem [thread:$0]  %s1, 512, %s27, [#allocation6], 128, 128, 8
    $region9: #{tpu_custom_call.1} parent=1 // pred_fallthru
      _
    // Predicated region
    $region10: #{tpu_custom_call.1} parent=1 // pred_check
      _
    $region11: #{tpu_custom_call.1} parent=1 // pred_check_branch
      %34 = sbr.rel (0) target = $region13
    $region12: #{tpu_custom_call.1} parent=1 // pred_region
      _
    $region13: #{tpu_custom_call.1} parent=1 // pred_fallthru
      _
    // Predicated region
    $region14: #{tpu_custom_call.1} parent=1 // pred_check
      _
    $region15: #{tpu_custom_call.1} parent=1 // pred_check_branch
      %36 = sbr.rel (0) target = $region17
    $region16: #{tpu_custom_call.1} parent=1 // pred_region
      %37 = dma.done [#allocation3], 128
    $region17: #{tpu_custom_call.1} parent=1 // pred_fallthru
      _
    // Predicated region
    $region18: #{tpu_custom_call.1} parent=1 // pred_check
      _
    $region19: #{tpu_custom_call.1} parent=1 // pred_check_branch
      %39 = sbr.rel (0) target = $region21
    $region20: #{tpu_custom_call.1} parent=1 // pred_region
      %40 = dma.done [#allocation6], 512
    $region21: #{tpu_custom_call.1} parent=1 // pred_fallthru
      _
    %v41 = vld [vmem:[#allocation2] sm:$0xff]
    %v42 = vld [vmem:[#allocation5] sm:$0xff]
    %v43 = vld [vmem:[#allocation5 + $0x8] sm:$0xff]
    %v44 = vld [vmem:[#allocation5 + $0x10] sm:$0xff]
    %v45 = vld [vmem:[#allocation5 + $0x18] sm:$0xff]
    %v46 = vld [vmem:[%s2] sm:$0x1]
    %v48 = vlaneseq
    %v49 = vshrl.u32 %v48, 7
    %v50 = vsub.s32 0, %v49
    %v51 = vrot.slane %v46, %v50
    %vm53 = vcmask 261120
    %v55 = vsel %vm53, %v41, 0
    %57 = vmatprep.subr.mxu0 0.0
    %58 = vmatpush1.msra.mxu0 0.0
    %59 = vmatprep.subr.mxu0 0.0
    %60 = vmatpush1.msra.mxu0 0.0
    %61 = vmatprep.subr.mxu0 0.0
    %62 = vmatpush1.msra.mxu0 0.0
    %63 = vmatprep.subr.mxu0 0.0
    %64 = vmatpush1.msra.mxu0 0.0
    %65 = vmatprep.subr.mxu0 0.0
    %66 = vmatpush1.msra.mxu0 0.0
    %67 = vmatprep.subr.mxu0 0.0
    %68 = vmatpush1.msra.mxu0 0.0
    %69 = vmatprep.subr.mxu0 0.0
    %70 = vmatpush1.msra.mxu0 0.0
    %71 = vmatprep.subr.mxu0 0.0
    %72 = vmatpush1.msra.mxu0 0.0
    %73 = vmatprep.subr.mxu0 0.0
    %74 = vmatpush1.msra.mxu0 0.0
    %75 = vmatprep.subr.mxu0 0.0
    %76 = vmatpush1.msra.mxu0 0.0
    %77 = vmatprep.subr.mxu0 0.0
    %78 = vmatpush1.msra.mxu0 0.0
    %79 = vmatprep.subr.mxu0 0.0
    %80 = vmatpush1.msra.mxu0 0.0
    %81 = vmatprep.subr.mxu0 0.0
    %82 = vmatpush1.msra.mxu0 %v45
    %83 = vmatprep.subr.mxu0 0.0
    %84 = vmatpush1.msra.mxu0 %v44
    %85 = vmatprep.subr.mxu0 0.0
    %86 = vmatpush1.msra.mxu0 %v43
    %87 = vmatprep.subr.mxu0 0.0
    %88 = vmatpush1.msra.mxu0 %v42
    %89 = vmatprep.subr.mxu0 0.0
    %90 = vmatpush2.msra.mxu0 0.0
    %91 = vmatprep.subr.mxu0 0.0
    %92 = vmatpush2.msra.mxu0 0.0
    %93 = vmatprep.subr.mxu0 0.0
    %94 = vmatpush2.msra.mxu0 0.0
    %95 = vmatprep.subr.mxu0 0.0
    %96 = vmatpush2.msra.mxu0 0.0
    %97 = vmatprep.subr.mxu0 0.0
    %98 = vmatpush2.msra.mxu0 0.0
    %99 = vmatprep.subr.mxu0 0.0
    %100 = vmatpush2.msra.mxu0 0.0
    %101 = vmatprep.subr.mxu0 0.0
    %102 = vmatpush2.msra.mxu0 0.0
    %103 = vmatprep.subr.mxu0 0.0
    %104 = vmatpush2.msra.mxu0 0.0
    %105 = vmatprep.subr.mxu0 0.0
    %106 = vmatpush2.msra.mxu0 0.0
    %107 = vmatprep.subr.mxu0 0.0
    %108 = vmatpush2.msra.mxu0 0.0
    %109 = vmatprep.subr.mxu0 0.0
    %110 = vmatpush2.msra.mxu0 0.0
    %111 = vmatprep.subr.mxu0 0.0
    %112 = vmatpush2.msra.mxu0 0.0
    %113 = vmatprep.subr.mxu0 0.0
    %114 = vmatpush2.msra.mxu0 0.0
    %115 = vmatprep.subr.mxu0 0.0
    %116 = vmatpush2.msra.mxu0 0.0
    %117 = vmatprep.subr.mxu0 0.0
    %118 = vmatpush2.msra.mxu0 0.0
    %119 = vmatprep.subr.mxu0 0.0
    %120 = vmatpush2.msra.mxu0 0.0
    %121 = vmatprep.mubr.f32.mxu0 0.0
    %122 = vmatmul.mubr.f32.gmra.mxu0 %v55
    %v123 = vpop.f32.mrf.mxu0
    %v124 = vadd.f32 %v51, %v123
    %v125 = vpop.f32.mrf.mxu0
    %126 = vdwg.mxu0
    %127 = vst [vmem:[#allocation7] sm:$0xff] %v124
    // Predicated region
    $region22: #{tpu_custom_call.1} parent=1 // pred_check
      _
    $region23: #{tpu_custom_call.1} parent=1 // pred_check_branch
      %129 = sbr.rel (0) target = $region25
    $region24: #{tpu_custom_call.1} parent=1 // pred_region
      %s131 = ssub.s32 128, 128
      %132 = vsyncadd [#allocation4], %s131
      %s134 = sshll.u32 [#allocation7], 4
      %s135 = int_to_ptr.vmem [resolvable:$true] %s134
      %137 = dma.vmem_to_hbm [thread:$0]  %s135, 128, %s3, [#allocation4]
    $region25: #{tpu_custom_call.1} parent=1 // pred_fallthru
      _
    // Predicated region
    $region26: #{tpu_custom_call.1} parent=1 // pred_check
      _
    $region27: #{tpu_custom_call.1} parent=1 // pred_check_branch
      %139 = sbr.rel (0) target = $region29
    $region28: #{tpu_custom_call.1} parent=1 // pred_region
      %140 = dma.done [#allocation4], 128
    $region29: #{tpu_custom_call.1} parent=1 // pred_fallthru
      _
    %141 = vsyncpa [#allocation3], 1
    %142 = vsyncpa [#allocation6], 1
    %143 = vsyncpa [#allocation4], 1

// kernel: tpu_custom_call.1
$region0: #{tpu_custom_call.1}
  #allocation0 [shape = 'u32[]', space=smem, size = 0x4, offset = 0x4, fixed_abs, tag = 'smem constant byte address 0x4 - core index']
  #allocation1 [shape = 'u32[144,128]{1,0:T(1,128)}', space=vmem, size = 0x12000, scoped, tag = 'internal scratch']
  %s0 = inlined_call_operand.hbm [shape: f32[8,32], index: 0, kind: input, shape index: {}]
  %s1 = inlined_call_operand.hbm [shape: f32[32,128], index: 1, kind: input, shape index: {}]
  %s2 = inlined_call_operand.vmem [shape: f32[1,128], index: 2, kind: input, shape index: {}]
  %s3 = inlined_call_operand.hbm [shape: f32[8,128], index: 3, kind: output, shape index: {}]
  %s4 = sld [smem:[#allocation0]]
  $region30: #{tpu_custom_call.1} parent=0
    _
  %s6 = ssub.s32 1, %s4
  %s7 = scalar_select 0, %s6, %s4
  $region1: #{tpu_custom_call.1} parent=0
    #allocation2 [shape = 'u8[4096]{0}', space=vmem, size = 0x1000, scoped, tag = 'input window, operand 0, single buffered']
    #allocation3 [shape = 's32[1]{0}', space=sflag, size = 0x4, scoped, tag = 'scoped memory for tpu_custom_call.1']
    #allocation4 [shape = 's32[1]{0}', space=sflag, size = 0x4, scoped, tag = 'scoped memory for tpu_custom_call.1']
    #allocation5 [shape = 'u8[16384]{0}', space=vmem, size = 0x4000, scoped, tag = 'input window, operand 1, single buffered']
    #allocation6 [shape = 's32[1]{0}', space=sflag, size = 0x4, scoped, tag = 'scoped memory for tpu_custom_call.1']
    #allocation7 [shape = 'u8[4096]{0}', space=vmem, size = 0x1000, scoped, tag = 'output window, operand 0, single buffered']
    %8 = vsyncpa [#allocation3], 0
    %9 = vsyncpa [#allocation6], 0
    %10 = vsyncpa [#allocation4], 0
    // Predicated region
    $region2: #{tpu_custom_call.1} parent=1 // pred_check
      _
    $region3: #{tpu_custom_call.1} parent=1 // pred_check_branch
      %12 = sbr.rel (0) target = $region5
    $region4: #{tpu_custom_call.1} parent=1 // pred_region
      %s14 = ssub.s32 128, 128
      %15 = vsyncadd [#allocation3], %s14
      %s17 = sshll.u32 [#allocation2], 4
      %s18 = int_to_ptr.vmem [resolvable:$true] %s17
      %20 = dma.hbm_to_vmem [thread:$0]  %s0, 128, %s18, [#allocation3]
    $region5: #{tpu_custom_call.1} parent=1 // pred_fallthru
      _
    // Predicated region
    $region6: #{tpu_custom_call.1} parent=1 // pred_check
      _
    $region7: #{tpu_custom_call.1} parent=1 // pred_check_branch
      %22 = sbr.rel (0) target = $region9
    $region8: #{tpu_custom_call.1} parent=1 // pred_region
      %s24 = ssub.s32 512, 512
      %25 = vsyncadd [#allocation6], %s24
      %s26 = sshll.u32 [#allocation5], 4
      %s27 = int_to_ptr.vmem [resolvable:$true] %s26
      %32 = dma.hbm_to_vmem [thread:$0]  %s1, 512, %s27, [#allocation6], 128, 128, 8
    $region9: #{tpu_custom_call.1} parent=1 // pred_fallthru
      _
    // Predicated region
    $region10: #{tpu_custom_call.1} parent=1 // pred_check
      _
    $region11: #{tpu_custom_call.1} parent=1 // pred_check_branch
      %34 = sbr.rel (0) target = $region13
    $region12: #{tpu_custom_call.1} parent=1 // pred_region
      _
    $region13: #{tpu_custom_call.1} parent=1 // pred_fallthru
      _
    // Predicated region
    $region14: #{tpu_custom_call.1} parent=1 // pred_check
      _
    $region15: #{tpu_custom_call.1} parent=1 // pred_check_branch
      %36 = sbr.rel (0) target = $region17
    $region16: #{tpu_custom_call.1} parent=1 // pred_region
      %37 = dma.done [#allocation3], 128
    $region17: #{tpu_custom_call.1} parent=1 // pred_fallthru
      _
    // Predicated region
    $region18: #{tpu_custom_call.1} parent=1 // pred_check
      _
    $region19: #{tpu_custom_call.1} parent=1 // pred_check_branch
      %39 = sbr.rel (0) target = $region21
    $region20: #{tpu_custom_call.1} parent=1 // pred_region
      %40 = dma.done [#allocation6], 512
    $region21: #{tpu_custom_call.1} parent=1 // pred_fallthru
      _
    %v41 = vld [vmem:[#allocation2] sm:$0xff]
    %v42 = vld [vmem:[#allocation5] sm:$0xff]
    %v43 = vld [vmem:[#allocation5 + $0x8] sm:$0xff]
    %v44 = vld [vmem:[#allocation5 + $0x10] sm:$0xff]
    %v45 = vld [vmem:[#allocation5 + $0x18] sm:$0xff]
    %v46 = vld [vmem:[%s2] sm:$0x1]
    %v48 = vlaneseq
    %v49 = vshrl.u32 %v48, 7
    %v50 = vsub.s32 0, %v49
    %v51 = vrot.slane %v46, %v50
    %vm53 = vcmask 261120
    %v55 = vsel %vm53, %v41, 0
    %57 = vmatprep.subr.mxu0 0.0
    %58 = vmatpush1.msra.mxu0 0.0
    %59 = vmatprep.subr.mxu0 0.0
    %60 = vmatpush1.msra.mxu0 0.0
    %61 = vmatprep.subr.mxu0 0.0
    %62 = vmatpush1.msra.mxu0 0.0
    %63 = vmatprep.subr.mxu0 0.0
    %64 = vmatpush1.msra.mxu0 0.0
    %65 = vmatprep.subr.mxu0 0.0
    %66 = vmatpush1.msra.mxu0 0.0
    %67 = vmatprep.subr.mxu0 0.0
    %68 = vmatpush1.msra.mxu0 0.0
    %69 = vmatprep.subr.mxu0 0.0
    %70 = vmatpush1.msra.mxu0 0.0
    %71 = vmatprep.subr.mxu0 0.0
    %72 = vmatpush1.msra.mxu0 0.0
    %73 = vmatprep.subr.mxu0 0.0
    %74 = vmatpush1.msra.mxu0 0.0
    %75 = vmatprep.subr.mxu0 0.0
    %76 = vmatpush1.msra.mxu0 0.0
    %77 = vmatprep.subr.mxu0 0.0
    %78 = vmatpush1.msra.mxu0 0.0
    %79 = vmatprep.subr.mxu0 0.0
    %80 = vmatpush1.msra.mxu0 0.0
    %81 = vmatprep.subr.mxu0 0.0
    %82 = vmatpush1.msra.mxu0 %v45
    %83 = vmatprep.subr.mxu0 0.0
    %84 = vmatpush1.msra.mxu0 %v44
    %85 = vmatprep.subr.mxu0 0.0
    %86 = vmatpush1.msra.mxu0 %v43
    %87 = vmatprep.subr.mxu0 0.0
    %88 = vmatpush1.msra.mxu0 %v42
    %89 = vmatprep.subr.mxu0 0.0
    %90 = vmatpush2.msra.mxu0 0.0
    %91 = vmatprep.subr.mxu0 0.0
    %92 = vmatpush2.msra.mxu0 0.0
    %93 = vmatprep.subr.mxu0 0.0
    %94 = vmatpush2.msra.mxu0 0.0
    %95 = vmatprep.subr.mxu0 0.0
    %96 = vmatpush2.msra.mxu0 0.0
    %97 = vmatprep.subr.mxu0 0.0
    %98 = vmatpush2.msra.mxu0 0.0
    %99 = vmatprep.subr.mxu0 0.0
    %100 = vmatpush2.msra.mxu0 0.0
    %101 = vmatprep.subr.mxu0 0.0
    %102 = vmatpush2.msra.mxu0 0.0
    %103 = vmatprep.subr.mxu0 0.0
    %104 = vmatpush2.msra.mxu0 0.0
    %105 = vmatprep.subr.mxu0 0.0
    %106 = vmatpush2.msra.mxu0 0.0
    %107 = vmatprep.subr.mxu0 0.0
    %108 = vmatpush2.msra.mxu0 0.0
    %109 = vmatprep.subr.mxu0 0.0
    %110 = vmatpush2.msra.mxu0 0.0
    %111 = vmatprep.subr.mxu0 0.0
    %112 = vmatpush2.msra.mxu0 0.0
    %113 = vmatprep.subr.mxu0 0.0
    %114 = vmatpush2.msra.mxu0 0.0
    %115 = vmatprep.subr.mxu0 0.0
    %116 = vmatpush2.msra.mxu0 0.0
    %117 = vmatprep.subr.mxu0 0.0
    %118 = vmatpush2.msra.mxu0 0.0
    %119 = vmatprep.subr.mxu0 0.0
    %120 = vmatpush2.msra.mxu0 0.0
    %121 = vmatprep.mubr.f32.mxu0 0.0
    %122 = vmatmul.mubr.f32.gmra.mxu0 %v55
    %v123 = vpop.f32.mrf.mxu0
    %v124 = vadd.f32 %v51, %v123
    %v125 = vpop.f32.mrf.mxu0
    %126 = vdwg.mxu0
    %127 = vst [vmem:[#allocation7] sm:$0xff] %v124
    // Predicated region
    $region22: #{tpu_custom_call.1} parent=1 // pred_check
      _
    $region23: #{tpu_custom_call.1} parent=1 // pred_check_branch
      %129 = sbr.rel (0) target = $region25
    $region24: #{tpu_custom_call.1} parent=1 // pred_region
      %s131 = ssub.s32 128, 128
      %132 = vsyncadd [#allocation4], %s131
      %s134 = sshll.u32 [#allocation7], 4
      %s135 = int_to_ptr.vmem [resolvable:$true] %s134
      %137 = dma.vmem_to_hbm [thread:$0]  %s135, 128, %s3, [#allocation4]
    $region25: #{tpu_custom_call.1} parent=1 // pred_fallthru
      _
    // Predicated region
    $region26: #{tpu_custom_call.1} parent=1 // pred_check
      _
    $region27: #{tpu_custom_call.1} parent=1 // pred_check_branch
      %139 = sbr.rel (0) target = $region29
    $region28: #{tpu_custom_call.1} parent=1 // pred_region
      %140 = dma.done [#allocation4], 128
    $region29: #{tpu_custom_call.1} parent=1 // pred_fallthru
      _
    %141 = vsyncpa [#allocation3], 1
    %142 = vsyncpa [#allocation6], 1
    %143 = vsyncpa [#allocation4], 1

</llo_original>
